<compile_context>
chip_gen: v5e
topology: v5e:2x2
jax: 0.10.0
libtpu: 0.0.40
codegen_flags: <defaults>
</compile_context>

<pallas_src>
import functools
import math

import jax
import jax.numpy as jnp
from jax import lax
from jax.experimental import pallas as pl
from jax.experimental.pallas import tpu as pltpu

_NEG_INF = -1e9
_LN_EPS = 1e-5
_VMEM_LIMIT = 32 * 1024 * 1024


# ---------------------------------------------------------------------------
# Kernels
# ---------------------------------------------------------------------------
def _mha_kernel(q_ref, k_ref, v_ref, bias_ref, wq_ref, wk_ref, wv_ref, wo_ref,
                o_ref, *, num_heads, head_dim, scale, eps):
    x_q = q_ref[0]            # [TQ,  E] f32 (also the residual)
    x_k = k_ref[0]            # [Skv, E] f32
    x_v = v_ref[0]            # [Skv, E] f32
    bias = bias_ref[0]        # [TQ, Skv] f32 additive mask bias (0 / -1e9)

    E = x_q.shape[-1]

    # Projections. Weights arrive pre-transposed ([E_in, E_out], bf16) -> plain MXU dots, no .T.
    q = jnp.dot(x_q.astype(jnp.bfloat16), wq_ref[...],
                preferred_element_type=jnp.float32)                      # [TQ,  E]
    k = jnp.dot(x_k.astype(jnp.bfloat16), wk_ref[...],
                preferred_element_type=jnp.float32)                      # [Skv, E]
    v = jnp.dot(x_v.astype(jnp.bfloat16), wv_ref[...],
                preferred_element_type=jnp.float32)                      # [Skv, E]

    qb = q.astype(jnp.bfloat16)
    kb = k.astype(jnp.bfloat16)
    vb = v.astype(jnp.bfloat16)

    # Contract the last dim of both operands (q @ k^T) without materializing a transpose.
    qk_dims = (((1,), (1,)), ((), ()))

    # TODO(synk): for large Skv, tile the KV axis with online-softmax (flash) m/l accumulators
    # instead of holding a full [TQ, Skv] score matrix per head.
    ctx_heads = []
    for h in range(num_heads):                          # static, unrolled; 2-D tiles only
        lo = h * head_dim
        qh = qb[:, lo:lo + head_dim]                    # [TQ,  dk]
        kh = kb[:, lo:lo + head_dim]                    # [Skv, dk]
        vh = vb[:, lo:lo + head_dim]                    # [Skv, dk]

        s = lax.dot_general(qh, kh, qk_dims,
                            preferred_element_type=jnp.float32)          # [TQ, Skv]
        s = s * scale + bias

        m = jnp.max(s, axis=-1, keepdims=True)
        e = jnp.exp(s - m)
        denom = jnp.sum(e, axis=-1, keepdims=True)
        p = e * pl.reciprocal(denom, approx=True)       # EUP reciprocal instead of a divide

        ctx_heads.append(jnp.dot(p.astype(jnp.bfloat16), vh,
                                 preferred_element_type=jnp.float32))    # [TQ, dk]

    ctx = jnp.concatenate(ctx_heads, axis=-1)           # [TQ, E]

    out = jnp.dot(ctx.astype(jnp.bfloat16), wo_ref[...],
                  preferred_element_type=jnp.float32)
    out = out + x_q                                     # residual (f32)

    # One-pass LayerNorm (fresh nn.LayerNorm => weight=1, bias=0, eps=1e-5).
    inv_e = jnp.float32(1.0 / E)
    mu = jnp.sum(out, axis=-1, keepdims=True) * inv_e
    var = jnp.sum(out * out, axis=-1, keepdims=True) * inv_e - mu * mu
    o_ref[0] = ((out - mu) * lax.rsqrt(var + eps)).astype(o_ref.dtype)


def _ffn_kernel(x_ref, w1_ref, b1_ref, w2_ref, b2_ref, o_ref, *, eps):
    x = x_ref[0]                                        # [TQ, E] f32 (residual)
    E = x.shape[-1]

    h = jnp.dot(x.astype(jnp.bfloat16), w1_ref[...],
                preferred_element_type=jnp.float32) + b1_ref[...]        # [TQ, F]
    # TODO(synk): nn.Dropout skipped (p = 0 in this config / eval mode -> identity).
    h = jnp.maximum(h, 0.0)

    y = jnp.dot(h.astype(jnp.bfloat16), w2_ref[...],
                preferred_element_type=jnp.float32) + b2_ref[...]        # [TQ, E]
    y = y + x                                           # residual (f32)

    inv_e = jnp.float32(1.0 / E)
    mu = jnp.sum(y, axis=-1, keepdims=True) * inv_e
    var = jnp.sum(y * y, axis=-1, keepdims=True) * inv_e - mu * mu
    o_ref[0] = ((y - mu) * lax.rsqrt(var + eps)).astype(o_ref.dtype)


# ---------------------------------------------------------------------------
# Wrappers
# ---------------------------------------------------------------------------
def _pick_q_tile(sq):
    if sq <= 128:
        return sq
    for t in (512, 256, 128):
        if sq % t == 0:
            return t
    return sq


def mha_layer(query, key, value, mask_bias, wq, wk, wv, wo, *, num_heads):
    B, Sq, E = query.shape
    Skv = key.shape[1]
    assert E % num_heads == 0
    head_dim = E // num_heads
    tq = _pick_q_tile(Sq)
    grid = (B, Sq // tq)

    # Pre-transpose once outside the kernel (loop-invariant) and cast to bf16.
    wq_t = wq.T.astype(jnp.bfloat16)
    wk_t = wk.T.astype(jnp.bfloat16)
    wv_t = wv.T.astype(jnp.bfloat16)
    wo_t = wo.T.astype(jnp.bfloat16)

    kernel = functools.partial(_mha_kernel, num_heads=num_heads, head_dim=head_dim,
                               scale=1.0 / math.sqrt(head_dim), eps=_LN_EPS)

    q_spec = pl.BlockSpec((1, tq, E), lambda b, qi: (b, qi, 0))
    kv_spec = pl.BlockSpec((1, Skv, E), lambda b, qi: (b, 0, 0))
    bias_spec = pl.BlockSpec((1, tq, Skv), lambda b, qi: (b, qi, 0))
    # Constant index_map -> weights stay resident in VMEM across grid steps.
    # TODO(synk): K-tile these GEMMs over E for large models instead of full residency.
    w_spec = pl.BlockSpec((E, E), lambda b, qi: (0, 0))

    return pl.pallas_call(
        kernel,
        out_shape=jax.ShapeDtypeStruct((B, Sq, E), jnp.float32),
        grid_spec=pltpu.PrefetchScalarGridSpec(
            num_scalar_prefetch=0,
            grid=grid,
            in_specs=[q_spec, kv_spec, kv_spec, bias_spec,
                      w_spec, w_spec, w_spec, w_spec],
            out_specs=q_spec),
        compiler_params=pltpu.CompilerParams(
            dimension_semantics=("parallel", "parallel"),
            vmem_limit_bytes=_VMEM_LIMIT),
    )(query, key, value, mask_bias, wq_t, wk_t, wv_t, wo_t)


def ffn_layer(x, w1, b1, w2, b2):
    B, S, E = x.shape
    F = w1.shape[0]
    tq = _pick_q_tile(S)
    grid = (B, S // tq)

    w1_t = w1.T.astype(jnp.bfloat16)          # [E, F]
    w2_t = w2.T.astype(jnp.bfloat16)          # [F, E]
    b1_2d = b1.reshape(1, F).astype(jnp.float32)
    b2_2d = b2.reshape(1, E).astype(jnp.float32)

    kernel = functools.partial(_ffn_kernel, eps=_LN_EPS)
    x_spec = pl.BlockSpec((1, tq, E), lambda b, qi: (b, qi, 0))

    return pl.pallas_call(
        kernel,
        out_shape=jax.ShapeDtypeStruct((B, S, E), jnp.float32),
        grid_spec=pltpu.PrefetchScalarGridSpec(
            num_scalar_prefetch=0,
            grid=grid,
            in_specs=[x_spec,
                      pl.BlockSpec((E, F), lambda b, qi: (0, 0)),
                      pl.BlockSpec((1, F), lambda b, qi: (0, 0)),
                      pl.BlockSpec((F, E), lambda b, qi: (0, 0)),
                      pl.BlockSpec((1, E), lambda b, qi: (0, 0))],
            out_specs=x_spec),
        compiler_params=pltpu.CompilerParams(
            dimension_semantics=("parallel", "parallel"),
            vmem_limit_bytes=_VMEM_LIMIT),
    )(x, w1_t, b1_2d, w2_t, b2_2d)


def transformer_decoder_layer(dec_inputs, enc_inputs,
                              dec_self_attn_mask, dec_enc_attn_mask,
                              params, *, num_heads):
    # Additive attention bias precomputed once in the wrapper: 0 = keep, -1e9 = masked.
    self_bias = jnp.where(dec_self_attn_mask, _NEG_INF, 0.0).astype(jnp.float32)
    cross_bias = jnp.where(dec_enc_attn_mask, _NEG_INF, 0.0).astype(jnp.float32)

    out = mha_layer(dec_inputs, dec_inputs, dec_inputs, self_bias,
                    *params["self_attn"], num_heads=num_heads)
    # Argument order follows the reference module exactly:
    #   dec_enc_attn(enc_inputs, output, output, dec_enc_attn_mask)
    out = mha_layer(enc_inputs, out, out, cross_bias,
                    *params["cross_attn"], num_heads=num_heads)
    out = ffn_layer(out, *params["ffn"])
    return out


# ---------------------------------------------------------------------------
# Pure-JAX reference (mirrors the PyTorch forward in f32)
# ---------------------------------------------------------------------------
def _mha_ref(q, k, v, mask, wq, wk, wv, wo, num_heads):
    B, Sq, E = q.shape
    dk = E // num_heads
    Q = (q @ wq.T).reshape(B, Sq, num_heads, dk).transpose(0, 2, 1, 3)
    K = (k @ wk.T).reshape(B, k.shape[1], num_heads, dk).transpose(0, 2, 1, 3)
    V = (v @ wv.T).reshape(B, v.shape[1], num_heads, dk).transpose(0, 2, 1, 3)
    scores = jnp.einsum('bhqd,bhkd->bhqk', Q, K) / math.sqrt(dk)
    scores = jnp.where(mask[:, None, :, :], _NEG_INF, scores)
    attn = jax.nn.softmax(scores, axis=-1)
    ctx = jnp.einsum('bhqk,bhkd->bhqd', attn, V).transpose(0, 2, 1, 3).reshape(B, Sq, E)
    out = ctx @ wo.T + q
    mu = out.mean(-1, keepdims=True)
    var = ((out - mu) ** 2).mean(-1, keepdims=True)
    return (out - mu) / jnp.sqrt(var + _LN_EPS)


def _ffn_ref(x, w1, b1, w2, b2):
    h = jnp.maximum(x @ w1.T + b1, 0.0)
    y = h @ w2.T + b2 + x
    mu = y.mean(-1, keepdims=True)
    var = ((y - mu) ** 2).mean(-1, keepdims=True)
    return (y - mu) / jnp.sqrt(var + _LN_EPS)


def _decoder_ref(dec, enc, self_mask, cross_mask, params, num_heads):
    out = _mha_ref(dec, dec, dec, self_mask, *params["self_attn"], num_heads)
    out = _mha_ref(enc, out, out, cross_mask, *params["cross_attn"], num_heads)
    return _ffn_ref(out, *params["ffn"])


def _xavier_uniform(key, fan_out, fan_in):
    bound = math.sqrt(6.0 / (fan_in + fan_out))
    return jax.random.uniform(key, (fan_out, fan_in), jnp.float32, -bound, bound)


if __name__ == "__main__":
    B, S, E, H, F = 2, 8, 32, 4, 64

    root = jax.random.PRNGKey(0)
    keys = jax.random.split(root, 16)

    dec_inputs = jax.random.normal(keys[0], (B, S, E), jnp.float32)
    enc_inputs = jax.random.normal(keys[1], (B, S, E), jnp.float32)

    # Self-attention mask: causal (True = masked out).
    causal = jnp.triu(jnp.ones((S, S), dtype=bool), k=1)
    dec_self_attn_mask = jnp.broadcast_to(causal, (B, S, S))
    # Cross-attention mask: random, with every query row guaranteed one visible key.
    dec_enc_attn_mask = jax.random.bernoulli(keys[2], 0.2, (B, S, S))
    dec_enc_attn_mask = dec_enc_attn_mask.at[:, :, 0].set(False)

    params = {
        "self_attn": (_xavier_uniform(keys[3], E, E), _xavier_uniform(keys[4], E, E),
                      _xavier_uniform(keys[5], E, E), _xavier_uniform(keys[6], E, E)),
        "cross_attn": (_xavier_uniform(keys[7], E, E), _xavier_uniform(keys[8], E, E),
                       _xavier_uniform(keys[9], E, E), _xavier_uniform(keys[10], E, E)),
        "ffn": (_xavier_uniform(keys[11], F, E),
                jax.random.uniform(keys[12], (F,), jnp.float32, -0.1, 0.1),
                _xavier_uniform(keys[13], E, F),
                jax.random.uniform(keys[14], (E,), jnp.float32, -0.1, 0.1)),
    }

    out = transformer_decoder_layer(dec_inputs, enc_inputs,
                                    dec_self_attn_mask, dec_enc_attn_mask,
                                    params, num_heads=H)
    out = jax.block_until_ready(out)

    ref = _decoder_ref(dec_inputs, enc_inputs, dec_self_attn_mask, dec_enc_attn_mask,
                       params, H)
    max_err = float(jnp.max(jnp.abs(out - ref)))
    # bf16 matmuls vs f32 reference -> loose-but-meaningful tolerance.
    assert jnp.allclose(out, ref, atol=5e-2, rtol=5e-2), f"mismatch vs reference (max abs err {max_err})"

    print("KERNEL_OK")
</pallas_src>

<mosaic_0001>
module attributes {stable_mosaic.version = 11 : i64} {
  func.func @_mha_kernel(%arg0: i32, %arg1: i32, %arg2: memref<1x8x32xf32, #tpu.memory_space<vmem>>, %arg3: memref<1x8x32xf32, #tpu.memory_space<vmem>>, %arg4: memref<1x8x32xf32, #tpu.memory_space<vmem>>, %arg5: memref<1x8x8xf32, #tpu.memory_space<vmem>>, %arg6: memref<32x32xbf16, #tpu.memory_space<vmem>>, %arg7: memref<32x32xbf16, #tpu.memory_space<vmem>>, %arg8: memref<32x32xbf16, #tpu.memory_space<vmem>>, %arg9: memref<32x32xbf16, #tpu.memory_space<vmem>>, %arg10: memref<1x8x32xf32, #tpu.memory_space<vmem>>) attributes {dimension_semantics = [#tpu.dimension_semantics<parallel>, #tpu.dimension_semantics<parallel>], iteration_bounds = array<i64: 2, 1>, scalar_prefetch = 0 : i64, scratch_operands = 0 : i64, tpu.core_type = #tpu.core_type<tc>, window_params = [{transform_indices = @transform_0, window_bounds = array<i64: 1, 8, 32>}, {transform_indices = @transform_1, window_bounds = array<i64: 1, 8, 32>}, {transform_indices = @transform_2, window_bounds = array<i64: 1, 8, 32>}, {transform_indices = @transform_3, window_bounds = array<i64: 1, 8, 8>}, {pipeline_mode = #tpu.pipeline_mode<synchronous>, transform_indices = @transform_4, window_bounds = array<i64: 32, 32>}, {pipeline_mode = #tpu.pipeline_mode<synchronous>, transform_indices = @transform_5, window_bounds = array<i64: 32, 32>}, {pipeline_mode = #tpu.pipeline_mode<synchronous>, transform_indices = @transform_6, window_bounds = array<i64: 32, 32>}, {pipeline_mode = #tpu.pipeline_mode<synchronous>, transform_indices = @transform_7, window_bounds = array<i64: 32, 32>}, {transform_indices = @transform_8, window_bounds = array<i64: 1, 8, 32>}]} {
    %c0 = arith.constant 0 : index
    %c0_0 = arith.constant 0 : index
    %c0_1 = arith.constant 0 : index
    %0 = vector.load %arg2[%c0, %c0_0, %c0_1] : memref<1x8x32xf32, #tpu.memory_space<vmem>>, vector<1x8x32xf32>
    %1 = vector.shape_cast %0 : vector<1x8x32xf32> to vector<8x32xf32>
    %c0_2 = arith.constant 0 : index
    %c0_3 = arith.constant 0 : index
    %c0_4 = arith.constant 0 : index
    %2 = vector.load %arg3[%c0_2, %c0_3, %c0_4] : memref<1x8x32xf32, #tpu.memory_space<vmem>>, vector<1x8x32xf32>
    %3 = vector.shape_cast %2 : vector<1x8x32xf32> to vector<8x32xf32>
    %c0_5 = arith.constant 0 : index
    %c0_6 = arith.constant 0 : index
    %c0_7 = arith.constant 0 : index
    %4 = vector.load %arg4[%c0_5, %c0_6, %c0_7] : memref<1x8x32xf32, #tpu.memory_space<vmem>>, vector<1x8x32xf32>
    %5 = vector.shape_cast %4 : vector<1x8x32xf32> to vector<8x32xf32>
    %c0_8 = arith.constant 0 : index
    %c0_9 = arith.constant 0 : index
    %c0_10 = arith.constant 0 : index
    %6 = vector.load %arg5[%c0_8, %c0_9, %c0_10] : memref<1x8x8xf32, #tpu.memory_space<vmem>>, vector<1x8x8xf32>
    %7 = vector.shape_cast %6 : vector<1x8x8xf32> to vector<8x8xf32>
    %8 = arith.truncf %1 : vector<8x32xf32> to vector<8x32xbf16>
    %c0_11 = arith.constant 0 : index
    %c0_12 = arith.constant 0 : index
    %9 = vector.load %arg6[%c0_11, %c0_12] : memref<32x32xbf16, #tpu.memory_space<vmem>>, vector<32x32xbf16>
    %cst = arith.constant dense<0.000000e+00> : vector<8x32xf32>
    %10 = tpu.matmul %8, %9, %cst {dimension_numbers = #tpu.dot_dimension_numbers<[1], [0], [0], [1], [0, 0, 1, 1], [], []>} : vector<8x32xbf16>, vector<32x32xbf16>, vector<8x32xf32> -> vector<8x32xf32>
    %11 = arith.truncf %3 : vector<8x32xf32> to vector<8x32xbf16>
    %c0_13 = arith.constant 0 : index
    %c0_14 = arith.constant 0 : index
    %12 = vector.load %arg7[%c0_13, %c0_14] : memref<32x32xbf16, #tpu.memory_space<vmem>>, vector<32x32xbf16>
    %cst_15 = arith.constant dense<0.000000e+00> : vector<8x32xf32>
    %13 = tpu.matmul %11, %12, %cst_15 {dimension_numbers = #tpu.dot_dimension_numbers<[1], [0], [0], [1], [0, 0, 1, 1], [], []>} : vector<8x32xbf16>, vector<32x32xbf16>, vector<8x32xf32> -> vector<8x32xf32>
    %14 = arith.truncf %5 : vector<8x32xf32> to vector<8x32xbf16>
    %c0_16 = arith.constant 0 : index
    %c0_17 = arith.constant 0 : index
    %15 = vector.load %arg8[%c0_16, %c0_17] : memref<32x32xbf16, #tpu.memory_space<vmem>>, vector<32x32xbf16>
    %cst_18 = arith.constant dense<0.000000e+00> : vector<8x32xf32>
    %16 = tpu.matmul %14, %15, %cst_18 {dimension_numbers = #tpu.dot_dimension_numbers<[1], [0], [0], [1], [0, 0, 1, 1], [], []>} : vector<8x32xbf16>, vector<32x32xbf16>, vector<8x32xf32> -> vector<8x32xf32>
    %17 = arith.truncf %10 : vector<8x32xf32> to vector<8x32xbf16>
    %18 = arith.truncf %13 : vector<8x32xf32> to vector<8x32xbf16>
    %19 = arith.truncf %16 : vector<8x32xf32> to vector<8x32xbf16>
    %20 = vector.extract_strided_slice %17 {offsets = [0, 0], sizes = [8, 8], strides = [1, 1]} : vector<8x32xbf16> to vector<8x8xbf16>
    %21 = vector.extract_strided_slice %18 {offsets = [0, 0], sizes = [8, 8], strides = [1, 1]} : vector<8x32xbf16> to vector<8x8xbf16>
    %22 = vector.extract_strided_slice %19 {offsets = [0, 0], sizes = [8, 8], strides = [1, 1]} : vector<8x32xbf16> to vector<8x8xbf16>
    %cst_19 = arith.constant dense<0.000000e+00> : vector<8x8xf32>
    %23 = tpu.matmul %20, %21, %cst_19 {dimension_numbers = #tpu.dot_dimension_numbers<[1], [1], [0], [0], [0, 0, 1, 0], [], []>} : vector<8x8xbf16>, vector<8x8xbf16>, vector<8x8xf32> -> vector<8x8xf32>
    %cst_20 = arith.constant 0.353553385 : f32
    %24 = vector.broadcast %cst_20 : f32 to vector<8x8xf32>
    %25 = arith.mulf %23, %24 : vector<8x8xf32>
    %26 = arith.addf %25, %7 : vector<8x8xf32>
    %cst_21 = arith.constant dense<0xFF800000> : vector<8xf32>
    %27 = vector.multi_reduction <maximumf>, %26, %cst_21 [1] : vector<8x8xf32> to vector<8xf32>
    %28 = vector.shape_cast %27 : vector<8xf32> to vector<8x1xf32>
    %29 = vector.broadcast %28 : vector<8x1xf32> to vector<8x8xf32>
    %30 = arith.subf %26, %29 : vector<8x8xf32>
    %31 = math.exp %30 : vector<8x8xf32>
    %cst_22 = arith.constant dense<0.000000e+00> : vector<8xf32>
    %32 = vector.multi_reduction <add>, %31, %cst_22 [1] : vector<8x8xf32> to vector<8xf32>
    %33 = vector.shape_cast %32 : vector<8xf32> to vector<8x1xf32>
    %34 = tpu.reciprocal %33 {approx = true} : vector<8x1xf32> -> vector<8x1xf32>
    %35 = vector.broadcast %34 : vector<8x1xf32> to vector<8x8xf32>
    %36 = arith.mulf %31, %35 : vector<8x8xf32>
    %37 = arith.truncf %36 : vector<8x8xf32> to vector<8x8xbf16>
    %cst_23 = arith.constant dense<0.000000e+00> : vector<8x8xf32>
    %38 = tpu.matmul %37, %22, %cst_23 {dimension_numbers = #tpu.dot_dimension_numbers<[1], [0], [0], [1], [0, 0, 1, 1], [], []>} : vector<8x8xbf16>, vector<8x8xbf16>, vector<8x8xf32> -> vector<8x8xf32>
    %39 = vector.extract_strided_slice %17 {offsets = [0, 8], sizes = [8, 8], strides = [1, 1]} : vector<8x32xbf16> to vector<8x8xbf16>
    %40 = vector.extract_strided_slice %18 {offsets = [0, 8], sizes = [8, 8], strides = [1, 1]} : vector<8x32xbf16> to vector<8x8xbf16>
    %41 = vector.extract_strided_slice %19 {offsets = [0, 8], sizes = [8, 8], strides = [1, 1]} : vector<8x32xbf16> to vector<8x8xbf16>
    %cst_24 = arith.constant dense<0.000000e+00> : vector<8x8xf32>
    %42 = tpu.matmul %39, %40, %cst_24 {dimension_numbers = #tpu.dot_dimension_numbers<[1], [1], [0], [0], [0, 0, 1, 0], [], []>} : vector<8x8xbf16>, vector<8x8xbf16>, vector<8x8xf32> -> vector<8x8xf32>
    %cst_25 = arith.constant 0.353553385 : f32
    %43 = vector.broadcast %cst_25 : f32 to vector<8x8xf32>
    %44 = arith.mulf %42, %43 : vector<8x8xf32>
    %45 = arith.addf %44, %7 : vector<8x8xf32>
    %cst_26 = arith.constant dense<0xFF800000> : vector<8xf32>
    %46 = vector.multi_reduction <maximumf>, %45, %cst_26 [1] : vector<8x8xf32> to vector<8xf32>
    %47 = vector.shape_cast %46 : vector<8xf32> to vector<8x1xf32>
    %48 = vector.broadcast %47 : vector<8x1xf32> to vector<8x8xf32>
    %49 = arith.subf %45, %48 : vector<8x8xf32>
    %50 = math.exp %49 : vector<8x8xf32>
    %cst_27 = arith.constant dense<0.000000e+00> : vector<8xf32>
    %51 = vector.multi_reduction <add>, %50, %cst_27 [1] : vector<8x8xf32> to vector<8xf32>
    %52 = vector.shape_cast %51 : vector<8xf32> to vector<8x1xf32>
    %53 = tpu.reciprocal %52 {approx = true} : vector<8x1xf32> -> vector<8x1xf32>
    %54 = vector.broadcast %53 : vector<8x1xf32> to vector<8x8xf32>
    %55 = arith.mulf %50, %54 : vector<8x8xf32>
    %56 = arith.truncf %55 : vector<8x8xf32> to vector<8x8xbf16>
    %cst_28 = arith.constant dense<0.000000e+00> : vector<8x8xf32>
    %57 = tpu.matmul %56, %41, %cst_28 {dimension_numbers = #tpu.dot_dimension_numbers<[1], [0], [0], [1], [0, 0, 1, 1], [], []>} : vector<8x8xbf16>, vector<8x8xbf16>, vector<8x8xf32> -> vector<8x8xf32>
    %58 = vector.extract_strided_slice %17 {offsets = [0, 16], sizes = [8, 8], strides = [1, 1]} : vector<8x32xbf16> to vector<8x8xbf16>
    %59 = vector.extract_strided_slice %18 {offsets = [0, 16], sizes = [8, 8], strides = [1, 1]} : vector<8x32xbf16> to vector<8x8xbf16>
    %60 = vector.extract_strided_slice %19 {offsets = [0, 16], sizes = [8, 8], strides = [1, 1]} : vector<8x32xbf16> to vector<8x8xbf16>
    %cst_29 = arith.constant dense<0.000000e+00> : vector<8x8xf32>
    %61 = tpu.matmul %58, %59, %cst_29 {dimension_numbers = #tpu.dot_dimension_numbers<[1], [1], [0], [0], [0, 0, 1, 0], [], []>} : vector<8x8xbf16>, vector<8x8xbf16>, vector<8x8xf32> -> vector<8x8xf32>
    %cst_30 = arith.constant 0.353553385 : f32
    %62 = vector.broadcast %cst_30 : f32 to vector<8x8xf32>
    %63 = arith.mulf %61, %62 : vector<8x8xf32>
    %64 = arith.addf %63, %7 : vector<8x8xf32>
    %cst_31 = arith.constant dense<0xFF800000> : vector<8xf32>
    %65 = vector.multi_reduction <maximumf>, %64, %cst_31 [1] : vector<8x8xf32> to vector<8xf32>
    %66 = vector.shape_cast %65 : vector<8xf32> to vector<8x1xf32>
    %67 = vector.broadcast %66 : vector<8x1xf32> to vector<8x8xf32>
    %68 = arith.subf %64, %67 : vector<8x8xf32>
    %69 = math.exp %68 : vector<8x8xf32>
    %cst_32 = arith.constant dense<0.000000e+00> : vector<8xf32>
    %70 = vector.multi_reduction <add>, %69, %cst_32 [1] : vector<8x8xf32> to vector<8xf32>
    %71 = vector.shape_cast %70 : vector<8xf32> to vector<8x1xf32>
    %72 = tpu.reciprocal %71 {approx = true} : vector<8x1xf32> -> vector<8x1xf32>
    %73 = vector.broadcast %72 : vector<8x1xf32> to vector<8x8xf32>
    %74 = arith.mulf %69, %73 : vector<8x8xf32>
    %75 = arith.truncf %74 : vector<8x8xf32> to vector<8x8xbf16>
    %cst_33 = arith.constant dense<0.000000e+00> : vector<8x8xf32>
    %76 = tpu.matmul %75, %60, %cst_33 {dimension_numbers = #tpu.dot_dimension_numbers<[1], [0], [0], [1], [0, 0, 1, 1], [], []>} : vector<8x8xbf16>, vector<8x8xbf16>, vector<8x8xf32> -> vector<8x8xf32>
    %77 = vector.extract_strided_slice %17 {offsets = [0, 24], sizes = [8, 8], strides = [1, 1]} : vector<8x32xbf16> to vector<8x8xbf16>
    %78 = vector.extract_strided_slice %18 {offsets = [0, 24], sizes = [8, 8], strides = [1, 1]} : vector<8x32xbf16> to vector<8x8xbf16>
    %79 = vector.extract_strided_slice %19 {offsets = [0, 24], sizes = [8, 8], strides = [1, 1]} : vector<8x32xbf16> to vector<8x8xbf16>
    %cst_34 = arith.constant dense<0.000000e+00> : vector<8x8xf32>
    %80 = tpu.matmul %77, %78, %cst_34 {dimension_numbers = #tpu.dot_dimension_numbers<[1], [1], [0], [0], [0, 0, 1, 0], [], []>} : vector<8x8xbf16>, vector<8x8xbf16>, vector<8x8xf32> -> vector<8x8xf32>
    %cst_35 = arith.constant 0.353553385 : f32
    %81 = vector.broadcast %cst_35 : f32 to vector<8x8xf32>
    %82 = arith.mulf %80, %81 : vector<8x8xf32>
    %83 = arith.addf %82, %7 : vector<8x8xf32>
    %cst_36 = arith.constant dense<0xFF800000> : vector<8xf32>
    %84 = vector.multi_reduction <maximumf>, %83, %cst_36 [1] : vector<8x8xf32> to vector<8xf32>
    %85 = vector.shape_cast %84 : vector<8xf32> to vector<8x1xf32>
    %86 = vector.broadcast %85 : vector<8x1xf32> to vector<8x8xf32>
    %87 = arith.subf %83, %86 : vector<8x8xf32>
    %88 = math.exp %87 : vector<8x8xf32>
    %cst_37 = arith.constant dense<0.000000e+00> : vector<8xf32>
    %89 = vector.multi_reduction <add>, %88, %cst_37 [1] : vector<8x8xf32> to vector<8xf32>
    %90 = vector.shape_cast %89 : vector<8xf32> to vector<8x1xf32>
    %91 = tpu.reciprocal %90 {approx = true} : vector<8x1xf32> -> vector<8x1xf32>
    %92 = vector.broadcast %91 : vector<8x1xf32> to vector<8x8xf32>
    %93 = arith.mulf %88, %92 : vector<8x8xf32>
    %94 = arith.truncf %93 : vector<8x8xf32> to vector<8x8xbf16>
    %cst_38 = arith.constant dense<0.000000e+00> : vector<8x8xf32>
    %95 = tpu.matmul %94, %79, %cst_38 {dimension_numbers = #tpu.dot_dimension_numbers<[1], [0], [0], [1], [0, 0, 1, 1], [], []>} : vector<8x8xbf16>, vector<8x8xbf16>, vector<8x8xf32> -> vector<8x8xf32>
    %96 = tpu.concatenate %38, %57, %76, %95 in 1 : vector<8x8xf32>, vector<8x8xf32>, vector<8x8xf32>, vector<8x8xf32> -> vector<8x32xf32>
    %97 = arith.truncf %96 : vector<8x32xf32> to vector<8x32xbf16>
    %c0_39 = arith.constant 0 : index
    %c0_40 = arith.constant 0 : index
    %98 = vector.load %arg9[%c0_39, %c0_40] : memref<32x32xbf16, #tpu.memory_space<vmem>>, vector<32x32xbf16>
    %cst_41 = arith.constant dense<0.000000e+00> : vector<8x32xf32>
    %99 = tpu.matmul %97, %98, %cst_41 {dimension_numbers = #tpu.dot_dimension_numbers<[1], [0], [0], [1], [0, 0, 1, 1], [], []>} : vector<8x32xbf16>, vector<32x32xbf16>, vector<8x32xf32> -> vector<8x32xf32>
    %100 = arith.addf %99, %1 : vector<8x32xf32>
    %cst_42 = arith.constant dense<0.000000e+00> : vector<8xf32>
    %101 = vector.multi_reduction <add>, %100, %cst_42 [1] : vector<8x32xf32> to vector<8xf32>
    %102 = vector.shape_cast %101 : vector<8xf32> to vector<8x1xf32>
    %cst_43 = arith.constant 3.125000e-02 : f32
    %103 = vector.broadcast %cst_43 : f32 to vector<8x1xf32>
    %104 = arith.mulf %102, %103 : vector<8x1xf32>
    %105 = arith.mulf %100, %100 : vector<8x32xf32>
    %cst_44 = arith.constant dense<0.000000e+00> : vector<8xf32>
    %106 = vector.multi_reduction <add>, %105, %cst_44 [1] : vector<8x32xf32> to vector<8xf32>
    %107 = vector.shape_cast %106 : vector<8xf32> to vector<8x1xf32>
    %cst_45 = arith.constant 3.125000e-02 : f32
    %108 = vector.broadcast %cst_45 : f32 to vector<8x1xf32>
    %109 = arith.mulf %107, %108 : vector<8x1xf32>
    %110 = arith.mulf %104, %104 : vector<8x1xf32>
    %111 = arith.subf %109, %110 : vector<8x1xf32>
    %112 = vector.broadcast %104 : vector<8x1xf32> to vector<8x32xf32>
    %113 = arith.subf %100, %112 : vector<8x32xf32>
    %cst_46 = arith.constant 9.99999974E-6 : f32
    %114 = vector.broadcast %cst_46 : f32 to vector<8x1xf32>
    %115 = arith.addf %111, %114 : vector<8x1xf32>
    %116 = math.rsqrt %115 : vector<8x1xf32>
    %117 = vector.broadcast %116 : vector<8x1xf32> to vector<8x32xf32>
    %118 = arith.mulf %113, %117 : vector<8x32xf32>
    %c0_47 = arith.constant 0 : index
    %c0_48 = arith.constant 0 : index
    %c0_49 = arith.constant 0 : index
    %119 = vector.load %arg10[%c0_47, %c0_48, %c0_49] : memref<1x8x32xf32, #tpu.memory_space<vmem>>, vector<1x8x32xf32>
    %120 = vector.shape_cast %119 : vector<1x8x32xf32> to vector<8x32xf32>
    %121 = vector.shape_cast %118 : vector<8x32xf32> to vector<1x8x32xf32>
    tpu.vector_store %arg10[%c0_47, %c0_48, %c0_49], %121 {strides = array<i32>} : memref<1x8x32xf32, #tpu.memory_space<vmem>>, vector<1x8x32xf32>,
    return
  }
  func.func @transform_0(%arg0: i32, %arg1: i32) -> (i32, i32, i32) {
    %c0_i32 = arith.constant 0 : i32
    %c0_i32_0 = arith.constant 0 : i32
    return %arg0, %arg1, %c0_i32 : i32, i32, i32
  }
  func.func @transform_1(%arg0: i32, %arg1: i32) -> (i32, i32, i32) {
    %c0_i32 = arith.constant 0 : i32
    %c0_i32_0 = arith.constant 0 : i32
    %c0_i32_1 = arith.constant 0 : i32
    return %arg0, %c0_i32, %c0_i32_0 : i32, i32, i32
  }
  func.func @transform_2(%arg0: i32, %arg1: i32) -> (i32, i32, i32) {
    %c0_i32 = arith.constant 0 : i32
    %c0_i32_0 = arith.constant 0 : i32
    %c0_i32_1 = arith.constant 0 : i32
    return %arg0, %c0_i32, %c0_i32_0 : i32, i32, i32
  }
  func.func @transform_3(%arg0: i32, %arg1: i32) -> (i32, i32, i32) {
    %c0_i32 = arith.constant 0 : i32
    %c0_i32_0 = arith.constant 0 : i32
    return %arg0, %arg1, %c0_i32 : i32, i32, i32
  }
  func.func @transform_4(%arg0: i32, %arg1: i32) -> (i32, i32) {
    %c0_i32 = arith.constant 0 : i32
    %c0_i32_0 = arith.constant 0 : i32
    %c0_i32_1 = arith.constant 0 : i32
    return %c0_i32, %c0_i32_0 : i32, i32
  }
  func.func @transform_5(%arg0: i32, %arg1: i32) -> (i32, i32) {
    %c0_i32 = arith.constant 0 : i32
    %c0_i32_0 = arith.constant 0 : i32
    %c0_i32_1 = arith.constant 0 : i32
    return %c0_i32, %c0_i32_0 : i32, i32
  }
  func.func @transform_6(%arg0: i32, %arg1: i32) -> (i32, i32) {
    %c0_i32 = arith.constant 0 : i32
    %c0_i32_0 = arith.constant 0 : i32
    %c0_i32_1 = arith.constant 0 : i32
    return %c0_i32, %c0_i32_0 : i32, i32
  }
  func.func @transform_7(%arg0: i32, %arg1: i32) -> (i32, i32) {
    %c0_i32 = arith.constant 0 : i32
    %c0_i32_0 = arith.constant 0 : i32
    %c0_i32_1 = arith.constant 0 : i32
    return %c0_i32, %c0_i32_0 : i32, i32
  }
  func.func @transform_8(%arg0: i32, %arg1: i32) -> (i32, i32, i32) {
    %c0_i32 = arith.constant 0 : i32
    %c0_i32_0 = arith.constant 0 : i32
    return %arg0, %arg1, %c0_i32 : i32, i32, i32
  }
}

</mosaic_0001>

<llo_original>
// kernel: tpu_custom_call.1
$region0: #{tpu_custom_call.1}
  #allocation0 [shape = 'u32[]', space=smem, size = 0x4, offset = 0x4, fixed_abs, tag = 'smem constant byte address 0x4 - core index']
  #allocation1 [shape = 'u32[72,128]{1,0:T(1,128)}', space=vmem, size = 0x9000, scoped, tag = 'internal scratch']
  %s0 = inlined_call_operand.hbm [shape: f32[2,8,32], index: 0, kind: input, shape index: {}]
  %s1 = inlined_call_operand.hbm [shape: f32[2,8,32], index: 1, kind: input, shape index: {}]
  %s2 = inlined_call_operand.hbm [shape: f32[2,8,32], index: 2, kind: input, shape index: {}]
  %s3 = inlined_call_operand.hbm [shape: f32[2,8,8], index: 3, kind: input, shape index: {}]
  %s4 = inlined_call_operand.hbm [shape: bf16[32,32], index: 4, kind: input, shape index: {}]
  %s5 = inlined_call_operand.hbm [shape: bf16[32,32], index: 5, kind: input, shape index: {}]
  %s6 = inlined_call_operand.hbm [shape: bf16[32,32], index: 6, kind: input, shape index: {}]
  %s7 = inlined_call_operand.hbm [shape: bf16[32,32], index: 7, kind: input, shape index: {}]
  %s8 = inlined_call_operand.hbm [shape: f32[2,8,32], index: 8, kind: output, shape index: {}]
  %s9 = sld [smem:[#allocation0]]
  $region97: #{tpu_custom_call.1} parent=0
    _
  %s11 = ssub.s32 1, %s9
  %s12 = scalar_select 0, %s11, %s9
  $region1: #{tpu_custom_call.1} parent=0
    #allocation2 [shape = 'u8[8192]{0}', space=vmem, size = 0x2000, scoped, tag = 'input window, operand 0']
    #allocation3 [shape = 's32[2]{0}', space=sflag, size = 0x8, scoped, tag = 'scoped memory for tpu_custom_call.1']
    #allocation4 [shape = 's32[2]{0}', space=sflag, size = 0x8, scoped, tag = 'scoped memory for tpu_custom_call.1']
    #allocation5 [shape = 'u8[8192]{0}', space=vmem, size = 0x2000, scoped, tag = 'input window, operand 1']
    #allocation6 [shape = 's32[2]{0}', space=sflag, size = 0x8, scoped, tag = 'scoped memory for tpu_custom_call.1']
    #allocation7 [shape = 'u8[8192]{0}', space=vmem, size = 0x2000, scoped, tag = 'input window, operand 2']
    #allocation8 [shape = 'u8[8192]{0}', space=vmem, size = 0x2000, scoped, tag = 'input window, operand 3']
    #allocation9 [shape = 's32[2]{0}', space=sflag, size = 0x8, scoped, tag = 'scoped memory for tpu_custom_call.1']
    #allocation10 [shape = 'u8[8192]{0}', space=vmem, size = 0x2000, scoped, tag = 'input window, operand 4, single buffered']
    #allocation11 [shape = 'u8[8192]{0}', space=vmem, size = 0x2000, scoped, tag = 'input window, operand 5, single buffered']
    #allocation12 [shape = 's32[1]{0}', space=sflag, size = 0x4, scoped, tag = 'scoped memory for tpu_custom_call.1']
    #allocation13 [shape = 'u8[8192]{0}', space=vmem, size = 0x2000, scoped, tag = 'input window, operand 6, single buffered']
    #allocation14 [shape = 'u8[8192]{0}', space=vmem, size = 0x2000, scoped, tag = 'input window, operand 7, single buffered']
    #allocation15 [shape = 's32[1]{0}', space=sflag, size = 0x4, scoped, tag = 'scoped memory for tpu_custom_call.1']
    #allocation16 [shape = 'u8[8192]{0}', space=vmem, size = 0x2000, scoped, tag = 'output window, operand 0']
    %13 = vsyncpa [#allocation3], 0
    %s14 = scalar_lea.sflag [#allocation3], 1
    %15 = vsyncpa %s14, 0
    %16 = vsyncpa [#allocation6], 0
    %s17 = scalar_lea.sflag [#allocation6], 1
    %18 = vsyncpa %s17, 0
    %19 = vsyncpa [#allocation9], 0
    %s20 = scalar_lea.sflag [#allocation9], 1
    %21 = vsyncpa %s20, 0
    %22 = vsyncpa [#allocation12], 0
    %23 = vsyncpa [#allocation15], 0
    %24 = vsyncpa [#allocation4], 0
    %s25 = scalar_lea.sflag [#allocation4], 1
    %26 = vsyncpa %s25, 0
    loop: start=0, step=1, limit=4
    $region2: #{tpu_custom_call.1} parent=1 // loop_pre_header
      _
    $region3: #{tpu_custom_call.1} parent=1 // loop_header
      %s28 = sphi 0, %s32
      %p29 = scmp.ge.s32.totalorder %s28, 4
      %s35 = sphi 0, %s47
      %s36 = sphi 0, %s43
      %s37 = sphi 0, %s35
      %s38 = sphi 0, %s36
      %s39 = sphi 0, %s37
      %s40 = sphi 0, %s38
      %s52 = sphi 0, %s54
      %s55 = sphi 0, %s52
      %s56 = sphi 0, %s55
      %s72 = sphi 0, %s56
      %s78 = sphi 0, %s80
      %s81 = sphi 0, %s78
      %s82 = sphi 0, %s81
      %s98 = sphi 0, %s82
      %s104 = sphi 0, %s106
      %s107 = sphi 0, %s104
      %s108 = sphi 0, %s107
      %s124 = sphi 0, %s108
      %s132 = sphi 0, %s134
      %s135 = sphi 0, %s132
      %s136 = sphi 0, %s135
      %s152 = sphi 0, %s136
      %s156 = sphi 0, %s156
      %s158 = sphi 0, %s156
      %s159 = sphi 0, %s158
      %s173 = sphi 0, %s159
      %s177 = sphi 0, %s177
      %s179 = sphi 0, %s177
      %s180 = sphi 0, %s179
      %s194 = sphi 0, %s180
      %s198 = sphi 0, %s198
      %s200 = sphi 0, %s198
      %s201 = sphi 0, %s200
      %s215 = sphi 0, %s201
      %s219 = sphi 0, %s219
      %s221 = sphi 0, %s219
      %s222 = sphi 0, %s221
      %s236 = sphi 0, %s222
      %s244 = sphi 0, %s246
      %s247 = sphi 0, %s244
      %s248 = sphi 0, %s247
      %s264 = sphi 0, %s248
    $region4: #{tpu_custom_call.1} parent=1 // loop_header_branch
      %31 = sbr.rel (%p29) target = $region8
    $region5: #{tpu_custom_call.1} parent=1 // loop_body
      %s33 = ssub.s32 %s28, 1
      %s34 = ssub.s32 %s28, 2
      %s41 = sadd.s32 1, %s36
      %p42 = scmp.ge.s32.totalorder %s41, 1
      %s43 = scalar_select %p42, 0, %s41
      %s44 = sadd.s32 1, %s35
      %s45 = scalar_select %p42, %s44, %s35
      %p46 = scmp.ge.s32.totalorder %s45, 2
      %s47 = scalar_select %p46, 0, %s45
      %s48 = ssub.s32 %s35, %s47
      %s49 = ssub.s32 %s36, %s43
      %s50 = sor.u32 %s48, %s49
      %p51 = scmp.eq.s32.totalorder %s50, 0
      %s53 = sadd.s32 %s52, 1
      %s54 = scalar_select %p51, %s52, %s53
      %p57 = pneg %p51
      %p58 = scmp.eq.s32.totalorder %s28, 1
      %p59 = por %p57, %p58
      %p60 = scmp.ne.s32.totalorder %s52, %s55
      %p61 = scmp.eq.s32.totalorder %s28, 0
      %p62 = por %p60, %p61
      %p63 = scmp.ne.s32.totalorder %s52, %s55
      %p64 = scmp.eq.s32.totalorder %s33, 1
      %p65 = por %p63, %p64
      %p66 = scmp.ne.s32.totalorder %s55, %s56
      %p67 = scmp.eq.s32.totalorder %s33, 0
      %p68 = por %p66, %p67
      %p69 = scmp.ne.s32.totalorder %s55, %s56
      %p70 = scmp.eq.s32.totalorder %s34, 1
      %p71 = por %p69, %p70
      %p73 = scmp.ne.s32.totalorder %s56, %s72
      %p74 = scmp.eq.s32.totalorder %s34, 0
      %p75 = por %p73, %p74
      %s76 = ssub.s32 %s35, %s47
      %p77 = scmp.eq.s32.totalorder %s76, 0
      %s79 = sadd.s32 %s78, 1
      %s80 = scalar_select %p77, %s78, %s79
      %p83 = pneg %p77
      %p84 = scmp.eq.s32.totalorder %s28, 1
      %p85 = por %p83, %p84
      %p86 = scmp.ne.s32.totalorder %s78, %s81
      %p87 = scmp.eq.s32.totalorder %s28, 0
      %p88 = por %p86, %p87
      %p89 = scmp.ne.s32.totalorder %s78, %s81
      %p90 = scmp.eq.s32.totalorder %s33, 1
      %p91 = por %p89, %p90
      %p92 = scmp.ne.s32.totalorder %s81, %s82
      %p93 = scmp.eq.s32.totalorder %s33, 0
      %p94 = por %p92, %p93
      %p95 = scmp.ne.s32.totalorder %s81, %s82
      %p96 = scmp.eq.s32.totalorder %s34, 1
      %p97 = por %p95, %p96
      %p99 = scmp.ne.s32.totalorder %s82, %s98
      %p100 = scmp.eq.s32.totalorder %s34, 0
      %p101 = por %p99, %p100
      %s102 = ssub.s32 %s35, %s47
      %p103 = scmp.eq.s32.totalorder %s102, 0
      %s105 = sadd.s32 %s104, 1
      %s106 = scalar_select %p103, %s104, %s105
      %p109 = pneg %p103
      %p110 = scmp.eq.s32.totalorder %s28, 1
      %p111 = por %p109, %p110
      %p112 = scmp.ne.s32.totalorder %s104, %s107
      %p113 = scmp.eq.s32.totalorder %s28, 0
      %p114 = por %p112, %p113
      %p115 = scmp.ne.s32.totalorder %s104, %s107
      %p116 = scmp.eq.s32.totalorder %s33, 1
      %p117 = por %p115, %p116
      %p118 = scmp.ne.s32.totalorder %s107, %s108
      %p119 = scmp.eq.s32.totalorder %s33, 0
      %p120 = por %p118, %p119
      %p121 = scmp.ne.s32.totalorder %s107, %s108
      %p122 = scmp.eq.s32.totalorder %s34, 1
      %p123 = por %p121, %p122
      %p125 = scmp.ne.s32.totalorder %s108, %s124
      %p126 = scmp.eq.s32.totalorder %s34, 0
      %p127 = por %p125, %p126
      %s128 = ssub.s32 %s35, %s47
      %s129 = ssub.s32 %s36, %s43
      %s130 = sor.u32 %s128, %s129
      %p131 = scmp.eq.s32.totalorder %s130, 0
      %s133 = sadd.s32 %s132, 1
      %s134 = scalar_select %p131, %s132, %s133
      %p137 = pneg %p131
      %p138 = scmp.eq.s32.totalorder %s28, 1
      %p139 = por %p137, %p138
      %p140 = scmp.ne.s32.totalorder %s132, %s135
      %p141 = scmp.eq.s32.totalorder %s28, 0
      %p142 = por %p140, %p141
      %p143 = scmp.ne.s32.totalorder %s132, %s135
      %p144 = scmp.eq.s32.totalorder %s33, 1
      %p145 = por %p143, %p144
      %p146 = scmp.ne.s32.totalorder %s135, %s136
      %p147 = scmp.eq.s32.totalorder %s33, 0
      %p148 = por %p146, %p147
      %p149 = scmp.ne.s32.totalorder %s135, %s136
      %p150 = scmp.eq.s32.totalorder %s34, 1
      %p151 = por %p149, %p150
      %p153 = scmp.ne.s32.totalorder %s136, %s152
      %p154 = scmp.eq.s32.totalorder %s34, 0
      %p155 = por %p153, %p154
      %s157 = sadd.s32 %s156, 1
      %p160 = scmp.eq.s32.totalorder %s28, 1
      %p161 = scmp.ne.s32.totalorder %s156, %s158
      %p162 = scmp.eq.s32.totalorder %s28, 0
      %p163 = por %p161, %p162
      %p164 = scmp.ne.s32.totalorder %s156, %s158
      %p165 = scmp.eq.s32.totalorder %s33, 1
      %p166 = por %p164, %p165
      %p167 = scmp.ne.s32.totalorder %s158, %s159
      %p168 = scmp.eq.s32.totalorder %s33, 0
      %p169 = por %p167, %p168
      %p170 = scmp.ne.s32.totalorder %s158, %s159
      %p171 = scmp.eq.s32.totalorder %s34, 1
      %p172 = por %p170, %p171
      %p174 = scmp.ne.s32.totalorder %s159, %s173
      %p175 = scmp.eq.s32.totalorder %s34, 0
      %p176 = por %p174, %p175
      %s178 = sadd.s32 %s177, 1
      %p181 = scmp.eq.s32.totalorder %s28, 1
      %p182 = scmp.ne.s32.totalorder %s177, %s179
      %p183 = scmp.eq.s32.totalorder %s28, 0
      %p184 = por %p182, %p183
      %p185 = scmp.ne.s32.totalorder %s177, %s179
      %p186 = scmp.eq.s32.totalorder %s33, 1
      %p187 = por %p185, %p186
      %p188 = scmp.ne.s32.totalorder %s179, %s180
      %p189 = scmp.eq.s32.totalorder %s33, 0
      %p190 = por %p188, %p189
      %p191 = scmp.ne.s32.totalorder %s179, %s180
      %p192 = scmp.eq.s32.totalorder %s34, 1
      %p193 = por %p191, %p192
      %p195 = scmp.ne.s32.totalorder %s180, %s194
      %p196 = scmp.eq.s32.totalorder %s34, 0
      %p197 = por %p195, %p196
      %s199 = sadd.s32 %s198, 1
      %p202 = scmp.eq.s32.totalorder %s28, 1
      %p203 = scmp.ne.s32.totalorder %s198, %s200
      %p204 = scmp.eq.s32.totalorder %s28, 0
      %p205 = por %p203, %p204
      %p206 = scmp.ne.s32.totalorder %s198, %s200
      %p207 = scmp.eq.s32.totalorder %s33, 1
      %p208 = por %p206, %p207
      %p209 = scmp.ne.s32.totalorder %s200, %s201
      %p210 = scmp.eq.s32.totalorder %s33, 0
      %p211 = por %p209, %p210
      %p212 = scmp.ne.s32.totalorder %s200, %s201
      %p213 = scmp.eq.s32.totalorder %s34, 1
      %p214 = por %p212, %p213
      %p216 = scmp.ne.s32.totalorder %s201, %s215
      %p217 = scmp.eq.s32.totalorder %s34, 0
      %p218 = por %p216, %p217
      %s220 = sadd.s32 %s219, 1
      %p223 = scmp.eq.s32.totalorder %s28, 1
      %p224 = scmp.ne.s32.totalorder %s219, %s221
      %p225 = scmp.eq.s32.totalorder %s28, 0
      %p226 = por %p224, %p225
      %p227 = scmp.ne.s32.totalorder %s219, %s221
      %p228 = scmp.eq.s32.totalorder %s33, 1
      %p229 = por %p227, %p228
      %p230 = scmp.ne.s32.totalorder %s221, %s222
      %p231 = scmp.eq.s32.totalorder %s33, 0
      %p232 = por %p230, %p231
      %p233 = scmp.ne.s32.totalorder %s221, %s222
      %p234 = scmp.eq.s32.totalorder %s34, 1
      %p235 = por %p233, %p234
      %p237 = scmp.ne.s32.totalorder %s222, %s236
      %p238 = scmp.eq.s32.totalorder %s34, 0
      %p239 = por %p237, %p238
      %s240 = ssub.s32 %s35, %s47
      %s241 = ssub.s32 %s36, %s43
      %s242 = sor.u32 %s240, %s241
      %p243 = scmp.eq.s32.totalorder %s242, 0
      %s245 = sadd.s32 %s244, 1
      %s246 = scalar_select %p243, %s244, %s245
      %p249 = pneg %p243
      %p250 = scmp.eq.s32.totalorder %s28, 1
      %p251 = por %p249, %p250
      %p252 = scmp.ne.s32.totalorder %s244, %s247
      %p253 = scmp.eq.s32.totalorder %s28, 0
      %p254 = por %p252, %p253
      %p255 = scmp.ne.s32.totalorder %s244, %s247
      %p256 = scmp.eq.s32.totalorder %s33, 1
      %p257 = por %p255, %p256
      %p258 = scmp.ne.s32.totalorder %s247, %s248
      %p259 = scmp.eq.s32.totalorder %s33, 0
      %p260 = por %p258, %p259
      %p261 = scmp.ne.s32.totalorder %s247, %s248
      %p262 = scmp.eq.s32.totalorder %s34, 1
      %p263 = por %p261, %p262
      %p265 = scmp.ne.s32.totalorder %s248, %s264
      %p266 = scmp.eq.s32.totalorder %s34, 0
      %p267 = por %p265, %p266
      %p268 = scmp.le.s32.totalorder 1, %s28
      %p269 = scmp.lt.s32.totalorder %s28, 3
      %p270 = pnand %p268, %p269
      %p271 = pneg %p270
      // Predicated region
      $region9: #{tpu_custom_call.1} parent=5 // pred_check
        _
      $region10: #{tpu_custom_call.1} parent=5 // pred_check_branch
        %273 = sbr.rel (%p270) target = $region12
      $region11: #{tpu_custom_call.1} parent=5 // pred_region
        %s274 = ssub.s32 %s28, 1
        // Predicated region
        $region13: #{tpu_custom_call.1} parent=11 // pred_check
          %p275 = pneg %p169
        $region14: #{tpu_custom_call.1} parent=11 // pred_check_branch
          %277 = sbr.rel (%p275) target = $region16
        $region15: #{tpu_custom_call.1} parent=11 // pred_region
          %279 = vsyncadd [#allocation9], 0
          %s280 = sshll.u32 %s4, 4
          %s281 = int_to_ptr.hbm [resolvable:$true] %s280
          %s282 = sshll.u32 [#allocation10], 4
          %s283 = int_to_ptr.vmem [resolvable:$true] %s282
          %288 = dma.hbm_to_vmem [thread:$0]  %s281, 256, %s283, [#allocation9], 64, 64, 4
        $region16: #{tpu_custom_call.1} parent=11 // pred_fallthru
          _
        // Predicated region
        $region17: #{tpu_custom_call.1} parent=11 // pred_check
          %p289 = pneg %p190
        $region18: #{tpu_custom_call.1} parent=11 // pred_check_branch
          %291 = sbr.rel (%p289) target = $region20
        $region19: #{tpu_custom_call.1} parent=11 // pred_region
          %293 = vsyncadd [#allocation12], 0
          %s294 = sshll.u32 %s5, 4
          %s295 = int_to_ptr.hbm [resolvable:$true] %s294
          %s296 = sshll.u32 [#allocation11], 4
          %s297 = int_to_ptr.vmem [resolvable:$true] %s296
          %302 = dma.hbm_to_vmem [thread:$0]  %s295, 256, %s297, [#allocation12], 64, 64, 4
        $region20: #{tpu_custom_call.1} parent=11 // pred_fallthru
          _
        // Predicated region
        $region21: #{tpu_custom_call.1} parent=11 // pred_check
          %p303 = pneg %p211
        $region22: #{tpu_custom_call.1} parent=11 // pred_check_branch
          %305 = sbr.rel (%p303) target = $region24
        $region23: #{tpu_custom_call.1} parent=11 // pred_region
          %307 = vsyncadd [#allocation12], 0
          %s308 = sshll.u32 %s6, 4
          %s309 = int_to_ptr.hbm [resolvable:$true] %s308
          %s310 = sshll.u32 [#allocation13], 4
          %s311 = int_to_ptr.vmem [resolvable:$true] %s310
          %316 = dma.hbm_to_vmem [thread:$0]  %s309, 256, %s311, [#allocation12], 64, 64, 4
        $region24: #{tpu_custom_call.1} parent=11 // pred_fallthru
          _
        // Predicated region
        $region25: #{tpu_custom_call.1} parent=11 // pred_check
          %p317 = pneg %p232
        $region26: #{tpu_custom_call.1} parent=11 // pred_check_branch
          %319 = sbr.rel (%p317) target = $region28
        $region27: #{tpu_custom_call.1} parent=11 // pred_region
          %321 = vsyncadd [#allocation15], 0
          %s322 = sshll.u32 %s7, 4
          %s323 = int_to_ptr.hbm [resolvable:$true] %s322
          %s324 = sshll.u32 [#allocation14], 4
          %s325 = int_to_ptr.vmem [resolvable:$true] %s324
          %330 = dma.hbm_to_vmem [thread:$0]  %s323, 256, %s325, [#allocation15], 64, 64, 4
        $region28: #{tpu_custom_call.1} parent=11 // pred_fallthru
          _
      $region12: #{tpu_custom_call.1} parent=5 // pred_fallthru
        _
      %p331 = scmp.lt.s32.totalorder %s28, 2
      // Predicated region
      $region29: #{tpu_custom_call.1} parent=5 // pred_check
        %p332 = pneg %p331
      $region30: #{tpu_custom_call.1} parent=5 // pred_check_branch
        %334 = sbr.rel (%p332) target = $region32
      $region31: #{tpu_custom_call.1} parent=5 // pred_region
        // Predicated region
        $region33: #{tpu_custom_call.1} parent=31 // pred_check
          %p335 = pneg %p62
        $region34: #{tpu_custom_call.1} parent=31 // pred_check_branch
          %337 = sbr.rel (%p335) target = $region36
        $region35: #{tpu_custom_call.1} parent=31 // pred_region
          %s338 = sand.u32 %s52, 1
          %s339 = scalar_lea.sflag [#allocation3], %s338
          %s340 = sand.u32 %s52, 1
          %s341 = smul.addr %s340, 8
          %s342 = scalar_lea.vmem [#allocation2], %s341
          %344 = vsyncadd %s339, 0
          %s345 = sadd.s32 %s36, %s35
          %s346 = smul.addr %s345, 8
          %s347 = scalar_lea.hbm %s0, %s346
          %s349 = sshll.u32 %s347, 4
          %s350 = int_to_ptr.hbm [resolvable:$true] %s349
          %s351 = sshll.u32 %s342, 4
          %s352 = int_to_ptr.vmem [resolvable:$true] %s351
          %354 = dma.hbm_to_vmem [thread:$0]  %s350, 128, %s352, %s339
        $region36: #{tpu_custom_call.1} parent=31 // pred_fallthru
          _
        // Predicated region
        $region37: #{tpu_custom_call.1} parent=31 // pred_check
          %p355 = pneg %p88
        $region38: #{tpu_custom_call.1} parent=31 // pred_check_branch
          %357 = sbr.rel (%p355) target = $region40
        $region39: #{tpu_custom_call.1} parent=31 // pred_region
          %s358 = sand.u32 %s28, 1
          %s359 = scalar_lea.sflag [#allocation6], %s358
          %s360 = sand.u32 %s78, 1
          %s361 = smul.addr %s360, 8
          %s362 = scalar_lea.vmem [#allocation5], %s361
          %364 = vsyncadd %s359, 0
          %s365 = smul.addr %s35, 8
          %s366 = scalar_lea.hbm %s1, %s365
          %s368 = sshll.u32 %s366, 4
          %s369 = int_to_ptr.hbm [resolvable:$true] %s368
          %s370 = sshll.u32 %s362, 4
          %s371 = int_to_ptr.vmem [resolvable:$true] %s370
          %373 = dma.hbm_to_vmem [thread:$0]  %s369, 128, %s371, %s359
        $region40: #{tpu_custom_call.1} parent=31 // pred_fallthru
          _
        // Predicated region
        $region41: #{tpu_custom_call.1} parent=31 // pred_check
          %p374 = pneg %p114
        $region42: #{tpu_custom_call.1} parent=31 // pred_check_branch
          %376 = sbr.rel (%p374) target = $region44
        $region43: #{tpu_custom_call.1} parent=31 // pred_region
          %s377 = sand.u32 %s28, 1
          %s378 = scalar_lea.sflag [#allocation6], %s377
          %s379 = sand.u32 %s104, 1
          %s380 = smul.addr %s379, 8
          %s381 = scalar_lea.vmem [#allocation7], %s380
          %383 = vsyncadd %s378, 0
          %s384 = smul.addr %s35, 8
          %s385 = scalar_lea.hbm %s2, %s384
          %s387 = sshll.u32 %s385, 4
          %s388 = int_to_ptr.hbm [resolvable:$true] %s387
          %s389 = sshll.u32 %s381, 4
          %s390 = int_to_ptr.vmem [resolvable:$true] %s389
          %392 = dma.hbm_to_vmem [thread:$0]  %s388, 128, %s390, %s378
        $region44: #{tpu_custom_call.1} parent=31 // pred_fallthru
          _
        // Predicated region
        $region45: #{tpu_custom_call.1} parent=31 // pred_check
          %p393 = pneg %p142
        $region46: #{tpu_custom_call.1} parent=31 // pred_check_branch
          %395 = sbr.rel (%p393) target = $region48
        $region47: #{tpu_custom_call.1} parent=31 // pred_region
          %s396 = sand.u32 %s28, 1
          %s397 = scalar_lea.sflag [#allocation9], %s396
          %s398 = sand.u32 %s132, 1
          %s399 = smul.addr %s398, 8
          %s400 = scalar_lea.vmem [#allocation8], %s399
          %402 = vsyncadd %s397, 0
          %s403 = sadd.s32 %s36, %s35
          %s404 = smul.addr %s403, 8
          %s405 = scalar_lea.hbm %s3, %s404
          %s407 = sshll.u32 %s405, 4
          %s408 = int_to_ptr.hbm [resolvable:$true] %s407
          %s409 = sshll.u32 %s400, 4
          %s410 = int_to_ptr.vmem [resolvable:$true] %s409
          %412 = dma.hbm_to_vmem [thread:$0]  %s408, 128, %s410, %s397
        $region48: #{tpu_custom_call.1} parent=31 // pred_fallthru
          _
      $region32: #{tpu_custom_call.1} parent=5 // pred_fallthru
        _
      %p413 = scmp.le.s32.totalorder 1, %s28
      %p414 = scmp.lt.s32.totalorder %s28, 3
      %p415 = pnand %p413, %p414
      %p416 = pneg %p415
      // Predicated region
      $region49: #{tpu_custom_call.1} parent=5 // pred_check
        _
      $region50: #{tpu_custom_call.1} parent=5 // pred_check_branch
        %418 = sbr.rel (%p415) target = $region52
      $region51: #{tpu_custom_call.1} parent=5 // pred_region
        %s419 = ssub.s32 %s28, 1
        %s420 = sand.u32 %s55, 1
        %s421 = scalar_lea.sflag [#allocation3], %s420
        %s422 = sand.u32 %s55, 1
        %s423 = smul.addr %s422, 8
        %s424 = scalar_lea.vmem [#allocation2], %s423
        // Predicated region
        $region53: #{tpu_custom_call.1} parent=51 // pred_check
          %p425 = pneg %p68
        $region54: #{tpu_custom_call.1} parent=51 // pred_check_branch
          %427 = sbr.rel (%p425) target = $region56
        $region55: #{tpu_custom_call.1} parent=51 // pred_region
          %429 = dma.done %s421, 128
        $region56: #{tpu_custom_call.1} parent=51 // pred_fallthru
          _
        %s430 = sand.u32 %s33, 1
        %s431 = scalar_lea.sflag [#allocation6], %s430
        %s432 = sand.u32 %s81, 1
        %s433 = smul.addr %s432, 8
        %s434 = scalar_lea.vmem [#allocation5], %s433
        // Predicated region
        $region57: #{tpu_custom_call.1} parent=51 // pred_check
          %p435 = pneg %p94
        $region58: #{tpu_custom_call.1} parent=51 // pred_check_branch
          %437 = sbr.rel (%p435) target = $region60
        $region59: #{tpu_custom_call.1} parent=51 // pred_region
          %439 = dma.done %s431, 128
        $region60: #{tpu_custom_call.1} parent=51 // pred_fallthru
          _
        %s440 = sand.u32 %s33, 1
        %s441 = scalar_lea.sflag [#allocation6], %s440
        %s442 = sand.u32 %s107, 1
        %s443 = smul.addr %s442, 8
        %s444 = scalar_lea.vmem [#allocation7], %s443
        // Predicated region
        $region61: #{tpu_custom_call.1} parent=51 // pred_check
          %p445 = pneg %p120
        $region62: #{tpu_custom_call.1} parent=51 // pred_check_branch
          %447 = sbr.rel (%p445) target = $region64
        $region63: #{tpu_custom_call.1} parent=51 // pred_region
          %449 = dma.done %s441, 128
        $region64: #{tpu_custom_call.1} parent=51 // pred_fallthru
          _
        %s450 = sand.u32 %s33, 1
        %s451 = scalar_lea.sflag [#allocation9], %s450
        %s452 = sand.u32 %s135, 1
        %s453 = smul.addr %s452, 8
        %s454 = scalar_lea.vmem [#allocation8], %s453
        // Predicated region
        $region65: #{tpu_custom_call.1} parent=51 // pred_check
          %p455 = pneg %p148
        $region66: #{tpu_custom_call.1} parent=51 // pred_check_branch
          %457 = sbr.rel (%p455) target = $region68
        $region67: #{tpu_custom_call.1} parent=51 // pred_region
          %459 = dma.done %s451, 128
        $region68: #{tpu_custom_call.1} parent=51 // pred_fallthru
          _
        // Predicated region
        $region69: #{tpu_custom_call.1} parent=51 // pred_check
          %p460 = pneg %p169
        $region70: #{tpu_custom_call.1} parent=51 // pred_check_branch
          %462 = sbr.rel (%p460) target = $region72
        $region71: #{tpu_custom_call.1} parent=51 // pred_region
          %464 = dma.done [#allocation9], 256
        $region72: #{tpu_custom_call.1} parent=51 // pred_fallthru
          _
        // Predicated region
        $region73: #{tpu_custom_call.1} parent=51 // pred_check
          %p465 = pneg %p190
        $region74: #{tpu_custom_call.1} parent=51 // pred_check_branch
          %467 = sbr.rel (%p465) target = $region76
        $region75: #{tpu_custom_call.1} parent=51 // pred_region
          %469 = dma.done [#allocation12], 256
        $region76: #{tpu_custom_call.1} parent=51 // pred_fallthru
          _
        // Predicated region
        $region77: #{tpu_custom_call.1} parent=51 // pred_check
          %p470 = pneg %p211
        $region78: #{tpu_custom_call.1} parent=51 // pred_check_branch
          %472 = sbr.rel (%p470) target = $region80
        $region79: #{tpu_custom_call.1} parent=51 // pred_region
          %474 = dma.done [#allocation12], 256
        $region80: #{tpu_custom_call.1} parent=51 // pred_fallthru
          _
        // Predicated region
        $region81: #{tpu_custom_call.1} parent=51 // pred_check
          %p475 = pneg %p232
        $region82: #{tpu_custom_call.1} parent=51 // pred_check_branch
          %477 = sbr.rel (%p475) target = $region84
        $region83: #{tpu_custom_call.1} parent=51 // pred_region
          %479 = dma.done [#allocation15], 256
        $region84: #{tpu_custom_call.1} parent=51 // pred_fallthru
          _
        %s480 = sand.u32 %s55, 1
        %s481 = scalar_lea.sflag [#allocation3], %s480
        %s482 = sand.u32 %s55, 1
        %s483 = smul.addr %s482, 8
        %s484 = scalar_lea.vmem [#allocation2], %s483
        %p485 = pneg %p68
        %p486 = pneg %p65
        %s487 = sand.u32 %s33, 1
        %s488 = scalar_lea.sflag [#allocation6], %s487
        %s489 = sand.u32 %s81, 1
        %s490 = smul.addr %s489, 8
        %s491 = scalar_lea.vmem [#allocation5], %s490
        %p492 = pneg %p94
        %p493 = pneg %p91
        %s494 = sand.u32 %s33, 1
        %s495 = scalar_lea.sflag [#allocation6], %s494
        %s496 = sand.u32 %s107, 1
        %s497 = smul.addr %s496, 8
        %s498 = scalar_lea.vmem [#allocation7], %s497
        %p499 = pneg %p120
        %p500 = pneg %p117
        %s501 = sand.u32 %s33, 1
        %s502 = scalar_lea.sflag [#allocation9], %s501
        %s503 = sand.u32 %s135, 1
        %s504 = smul.addr %s503, 8
        %s505 = scalar_lea.vmem [#allocation8], %s504
        %p506 = pneg %p148
        %p507 = pneg %p145
        %p508 = pneg %p169
        %p509 = pneg %p166
        %p510 = pneg %p190
        %p511 = pneg %p187
        %p512 = pneg %p211
        %p513 = pneg %p208
        %p514 = pneg %p232
        %p515 = pneg %p229
        %p516 = pneg %p260
        %p517 = pneg %p257
        %s518 = sand.u32 %s247, 1
        %s519 = scalar_lea.sflag [#allocation4], %s518
        %s520 = sand.u32 %s247, 1
        %s521 = smul.addr %s520, 8
        %s522 = scalar_lea.vmem [#allocation16], %s521
        %v524 = vld [vmem:[%s424] sm:$0xff]
        %v525 = vld [vmem:[%s434] sm:$0xff]
        %v526 = vld [vmem:[%s444] sm:$0xff]
        %v527 = vld [vmem:[%s454] sm:$0xff]
        %v528 = vpack.c.bf16 %v524, %v524
        %v529 = vld [vmem:[#allocation10] sm:$0xf]
        %v530 = vld [vmem:[#allocation10 + $0x4] sm:$0xf]
        %v531 = vld [vmem:[#allocation10 + $0x8] sm:$0xf]
        %v532 = vld [vmem:[#allocation10 + $0xc] sm:$0xf]
        %v537 = vunpack.c.l.b16 %v529
        %v538 = vunpack.c.l.b16 %v530
        %v539 = vunpack.c.l.b16 %v531
        %v540 = vunpack.c.l.b16 %v532
        %v541 = vpack.c.b16 %v538, %v537
        %v542 = vpack.c.b16 %v540, %v539
        %vm545 = vcmask 261120
        %v547 = vsel %vm545, %v528, 0
        %549 = vmatpush.bf16.msra.mxu0 0
        %550 = vmatpush.bf16.msra.mxu0 0
        %551 = vmatpush.bf16.msra.mxu0 0
        %552 = vmatpush.bf16.msra.mxu0 0
        %553 = vmatpush.bf16.msra.mxu0 0
        %554 = vmatpush.bf16.msra.mxu0 0
        %555 = vmatpush.bf16.msra.mxu0 %v542
        %556 = vmatpush.bf16.msra.mxu0 %v541
        %557 = vmatmul.bf16.gmra.mxu0 %v547
        %v558 = vpop.f32.mrf.mxu0
        %v559 = vadd.f32 0.0, %v558
        %v560 = vpop.f32.mrf.mxu0
        %561 = vdwg.mxu0
        %v562 = vpack.c.bf16 %v525, %v525
        %v563 = vld [vmem:[#allocation11] sm:$0xf]
        %v564 = vld [vmem:[#allocation11 + $0x4] sm:$0xf]
        %v565 = vld [vmem:[#allocation11 + $0x8] sm:$0xf]
        %v566 = vld [vmem:[#allocation11 + $0xc] sm:$0xf]
        %v571 = vunpack.c.l.b16 %v563
        %v572 = vunpack.c.l.b16 %v564
        %v573 = vunpack.c.l.b16 %v565
        %v574 = vunpack.c.l.b16 %v566
        %v575 = vpack.c.b16 %v572, %v571
        %v576 = vpack.c.b16 %v574, %v573
        %v580 = vsel %vm545, %v562, 0
        %582 = vmatpush.bf16.msra.mxu0 0
        %583 = vmatpush.bf16.msra.mxu0 0
        %584 = vmatpush.bf16.msra.mxu0 0
        %585 = vmatpush.bf16.msra.mxu0 0
        %586 = vmatpush.bf16.msra.mxu0 0
        %587 = vmatpush.bf16.msra.mxu0 0
        %588 = vmatpush.bf16.msra.mxu0 %v576
        %589 = vmatpush.bf16.msra.mxu0 %v575
        %590 = vmatmul.bf16.gmra.mxu0 %v580
        %v591 = vpop.f32.mrf.mxu0
        %v592 = vadd.f32 0.0, %v591
        %v593 = vpop.f32.mrf.mxu0
        %594 = vdwg.mxu0
        %v595 = vpack.c.bf16 %v526, %v526
        %v596 = vld [vmem:[#allocation13] sm:$0xf]
        %v597 = vld [vmem:[#allocation13 + $0x4] sm:$0xf]
        %v598 = vld [vmem:[#allocation13 + $0x8] sm:$0xf]
        %v599 = vld [vmem:[#allocation13 + $0xc] sm:$0xf]
        %v604 = vunpack.c.l.b16 %v596
        %v605 = vunpack.c.l.b16 %v597
        %v606 = vunpack.c.l.b16 %v598
        %v607 = vunpack.c.l.b16 %v599
        %v608 = vpack.c.b16 %v605, %v604
        %v609 = vpack.c.b16 %v607, %v606
        %v613 = vsel %vm545, %v595, 0
        %615 = vmatpush.bf16.msra.mxu0 0
        %616 = vmatpush.bf16.msra.mxu0 0
        %617 = vmatpush.bf16.msra.mxu0 0
        %618 = vmatpush.bf16.msra.mxu0 0
        %619 = vmatpush.bf16.msra.mxu0 0
        %620 = vmatpush.bf16.msra.mxu0 0
        %621 = vmatpush.bf16.msra.mxu0 %v609
        %622 = vmatpush.bf16.msra.mxu0 %v608
        %623 = vmatmul.bf16.gmra.mxu0 %v613
        %v624 = vpop.f32.mrf.mxu0
        %v625 = vadd.f32 0.0, %v624
        %v626 = vpop.f32.mrf.mxu0
        %627 = vdwg.mxu0
        %v628 = vpack.c.bf16 %v559, %v559
        %v629 = vpack.c.bf16 %v592, %v592
        %v630 = vpack.c.bf16 %v625, %v625
        %vm631 = vcmask 64512
        %v633 = vsel %vm631, %v628, 0
        %v636 = vsel %vm631, %v629, 0
        %638 = vmatpush.bf16.xpose.msra.mxu0 0
        %639 = vmatpush.bf16.xpose.msra.mxu0 0
        %640 = vmatpush.bf16.xpose.msra.mxu0 0
        %641 = vmatpush.bf16.xpose.msra.mxu0 0
        %642 = vmatpush.bf16.xpose.msra.mxu0 0
        %643 = vmatpush.bf16.xpose.msra.mxu0 0
        %644 = vmatpush.bf16.xpose.msra.mxu0 0
        %645 = vmatpush.bf16.xpose.msra.mxu0 %v636
        %646 = vmatmul.bf16.gmra.mxu0 %v633
        %v647 = vpop.f32.mrf.mxu0
        %v648 = vadd.f32 0.0, %v647
        %v649 = vpop.f32.mrf.mxu0
        %650 = vdwg.mxu0
        %v651 = vmul.f32 %v648, 0.35355338
        %v652 = vadd.f32 %v651, %v527
        %v653 = vsel %vm631, %v652, -inf
        %654 = vmax.xlane.f32.xlu0 %v653
        %v655 = vpop.xlane.xlu0 %654
        %v656 = vsub.f32 %v652, %v655
        %v657 = vmul.f32 %v656, 1.442695
        %v658 = vpow.pop %v657
        %v659 = vsel %vm631, %v658, 0.0
        %660 = vadd.xlane.f32.xlu0 %v659
        %v661 = vpop.xlane.xlu0 %660
        %v662 = vrcp.pop %v661
        %v663 = vmul.f32 %v658, %v662
        %v664 = vpack.c.bf16 %v663, %v663
        %v666 = vsel %vm631, %v664, 0
        %vm668 = vcmask 1043456
        %v670 = vsel %vm668, %v630, 0
        %672 = vmatpush.bf16.msra.mxu0 0
        %673 = vmatpush.bf16.msra.mxu0 0
        %674 = vmatpush.bf16.msra.mxu0 0
        %675 = vmatpush.bf16.msra.mxu0 0
        %676 = vmatpush.bf16.msra.mxu0 0
        %677 = vmatpush.bf16.msra.mxu0 0
        %678 = vmatpush.bf16.msra.mxu0 0
        %679 = vmatpush.bf16.msra.mxu0 %v670
        %680 = vmatmul.bf16.gmra.mxu0 %v666
        %v681 = vpop.f32.mrf.mxu0
        %v682 = vadd.f32 0.0, %v681
        %v683 = vpop.f32.mrf.mxu0
        %684 = vdwg.mxu0
        %v686 = vunpack.c.l.b16 %v628
        %v687 = vpack.c.b16 %v686, %v686
        %688 = vrot.lane.b32.xlu0 %v687, 120
        %v689 = vpop.permute.xlu0 %688
        %v691 = vunpack.c.l.b16 %v629
        %v692 = vpack.c.b16 %v691, %v691
        %693 = vrot.lane.b32.xlu0 %v692, 120
        %v694 = vpop.permute.xlu0 %693
        %v696 = vsel %vm631, %v689, 0
        %v699 = vsel %vm631, %v694, 0
        %701 = vmatpush.bf16.xpose.msra.mxu0 0
        %702 = vmatpush.bf16.xpose.msra.mxu0 0
        %703 = vmatpush.bf16.xpose.msra.mxu0 0
        %704 = vmatpush.bf16.xpose.msra.mxu0 0
        %705 = vmatpush.bf16.xpose.msra.mxu0 0
        %706 = vmatpush.bf16.xpose.msra.mxu0 0
        %707 = vmatpush.bf16.xpose.msra.mxu0 0
        %708 = vmatpush.bf16.xpose.msra.mxu0 %v699
        %709 = vmatmul.bf16.gmra.mxu0 %v696
        %v710 = vpop.f32.mrf.mxu0
        %v711 = vadd.f32 0.0, %v710
        %v712 = vpop.f32.mrf.mxu0
        %713 = vdwg.mxu0
        %v714 = vmul.f32 %v711, 0.35355338
        %v715 = vadd.f32 %v714, %v527
        %v716 = vsel %vm631, %v715, -inf
        %717 = vmax.xlane.f32.xlu0 %v716
        %v718 = vpop.xlane.xlu0 %717
        %v719 = vsub.f32 %v715, %v718
        %v720 = vmul.f32 %v719, 1.442695
        %v721 = vpow.pop %v720
        %v722 = vsel %vm631, %v721, 0.0
        %723 = vadd.xlane.f32.xlu0 %v722
        %v724 = vpop.xlane.xlu0 %723
        %v725 = vrcp.pop %v724
        %v726 = vmul.f32 %v721, %v725
        %v727 = vpack.c.bf16 %v726, %v726
        %v729 = vunpack.c.l.b16 %v630
        %v730 = vpack.c.b16 %v729, %v729
        %731 = vrot.lane.b32.xlu0 %v730, 120
        %v732 = vpop.permute.xlu0 %731
        %v734 = vsel %vm631, %v727, 0
        %v737 = vsel %vm668, %v732, 0
        %739 = vmatpush.bf16.msra.mxu0 0
        %740 = vmatpush.bf16.msra.mxu0 0
        %741 = vmatpush.bf16.msra.mxu0 0
        %742 = vmatpush.bf16.msra.mxu0 0
        %743 = vmatpush.bf16.msra.mxu0 0
        %744 = vmatpush.bf16.msra.mxu0 0
        %745 = vmatpush.bf16.msra.mxu0 0
        %746 = vmatpush.bf16.msra.mxu0 %v737
        %747 = vmatmul.bf16.gmra.mxu0 %v734
        %v748 = vpop.f32.mrf.mxu0
        %v749 = vadd.f32 0.0, %v748
        %v750 = vpop.f32.mrf.mxu0
        %751 = vdwg.mxu0
        %752 = vrot.lane.b32.xlu0 %v687, 112
        %v753 = vpop.permute.xlu0 %752
        %754 = vrot.lane.b32.xlu0 %v692, 112
        %v755 = vpop.permute.xlu0 %754
        %v757 = vsel %vm631, %v753, 0
        %v760 = vsel %vm631, %v755, 0
        %762 = vmatpush.bf16.xpose.msra.mxu0 0
        %763 = vmatpush.bf16.xpose.msra.mxu0 0
        %764 = vmatpush.bf16.xpose.msra.mxu0 0
        %765 = vmatpush.bf16.xpose.msra.mxu0 0
        %766 = vmatpush.bf16.xpose.msra.mxu0 0
        %767 = vmatpush.bf16.xpose.msra.mxu0 0
        %768 = vmatpush.bf16.xpose.msra.mxu0 0
        %769 = vmatpush.bf16.xpose.msra.mxu0 %v760
        %770 = vmatmul.bf16.gmra.mxu0 %v757
        %v771 = vpop.f32.mrf.mxu0
        %v772 = vadd.f32 0.0, %v771
        %v773 = vpop.f32.mrf.mxu0
        %774 = vdwg.mxu0
        %v775 = vmul.f32 %v772, 0.35355338
        %v776 = vadd.f32 %v775, %v527
        %v777 = vsel %vm631, %v776, -inf
        %778 = vmax.xlane.f32.xlu0 %v777
        %v779 = vpop.xlane.xlu0 %778
        %v780 = vsub.f32 %v776, %v779
        %v781 = vmul.f32 %v780, 1.442695
        %v782 = vpow.pop %v781
        %v783 = vsel %vm631, %v782, 0.0
        %784 = vadd.xlane.f32.xlu0 %v783
        %v785 = vpop.xlane.xlu0 %784
        %v786 = vrcp.pop %v785
        %v787 = vmul.f32 %v782, %v786
        %v788 = vpack.c.bf16 %v787, %v787
        %789 = vrot.lane.b32.xlu0 %v730, 112
        %v790 = vpop.permute.xlu0 %789
        %v792 = vsel %vm631, %v788, 0
        %v795 = vsel %vm668, %v790, 0
        %797 = vmatpush.bf16.msra.mxu0 0
        %798 = vmatpush.bf16.msra.mxu0 0
        %799 = vmatpush.bf16.msra.mxu0 0
        %800 = vmatpush.bf16.msra.mxu0 0
        %801 = vmatpush.bf16.msra.mxu0 0
        %802 = vmatpush.bf16.msra.mxu0 0
        %803 = vmatpush.bf16.msra.mxu0 0
        %804 = vmatpush.bf16.msra.mxu0 %v795
        %805 = vmatmul.bf16.gmra.mxu0 %v792
        %v806 = vpop.f32.mrf.mxu0
        %v807 = vadd.f32 0.0, %v806
        %v808 = vpop.f32.mrf.mxu0
        %809 = vdwg.mxu0
        %810 = vrot.lane.b32.xlu0 %v687, 104
        %v811 = vpop.permute.xlu0 %810
        %812 = vrot.lane.b32.xlu0 %v692, 104
        %v813 = vpop.permute.xlu0 %812
        %v815 = vsel %vm631, %v811, 0
        %v818 = vsel %vm631, %v813, 0
        %820 = vmatpush.bf16.xpose.msra.mxu0 0
        %821 = vmatpush.bf16.xpose.msra.mxu0 0
        %822 = vmatpush.bf16.xpose.msra.mxu0 0
        %823 = vmatpush.bf16.xpose.msra.mxu0 0
        %824 = vmatpush.bf16.xpose.msra.mxu0 0
        %825 = vmatpush.bf16.xpose.msra.mxu0 0
        %826 = vmatpush.bf16.xpose.msra.mxu0 0
        %827 = vmatpush.bf16.xpose.msra.mxu0 %v818
        %828 = vmatmul.bf16.gmra.mxu0 %v815
        %v829 = vpop.f32.mrf.mxu0
        %v830 = vadd.f32 0.0, %v829
        %v831 = vpop.f32.mrf.mxu0
        %832 = vdwg.mxu0
        %v833 = vmul.f32 %v830, 0.35355338
        %v834 = vadd.f32 %v833, %v527
        %v835 = vsel %vm631, %v834, -inf
        %836 = vmax.xlane.f32.xlu0 %v835
        %v837 = vpop.xlane.xlu0 %836
        %v838 = vsub.f32 %v834, %v837
        %v839 = vmul.f32 %v838, 1.442695
        %v840 = vpow.pop %v839
        %v841 = vsel %vm631, %v840, 0.0
        %842 = vadd.xlane.f32.xlu0 %v841
        %v843 = vpop.xlane.xlu0 %842
        %v844 = vrcp.pop %v843
        %v845 = vmul.f32 %v840, %v844
        %v846 = vpack.c.bf16 %v845, %v845
        %847 = vrot.lane.b32.xlu0 %v730, 104
        %v848 = vpop.permute.xlu0 %847
        %v850 = vsel %vm631, %v846, 0
        %v853 = vsel %vm668, %v848, 0
        %855 = vmatpush.bf16.msra.mxu0 0
        %856 = vmatpush.bf16.msra.mxu0 0
        %857 = vmatpush.bf16.msra.mxu0 0
        %858 = vmatpush.bf16.msra.mxu0 0
        %859 = vmatpush.bf16.msra.mxu0 0
        %860 = vmatpush.bf16.msra.mxu0 0
        %861 = vmatpush.bf16.msra.mxu0 0
        %862 = vmatpush.bf16.msra.mxu0 %v853
        %863 = vmatmul.bf16.gmra.mxu0 %v850
        %v864 = vpop.f32.mrf.mxu0
        %v865 = vadd.f32 0.0, %v864
        %v866 = vpop.f32.mrf.mxu0
        %867 = vdwg.mxu0
        %869 = vrot.lane.b32.xlu0 %v749, 8
        %v870 = vpop.permute.xlu0 %869
        %873 = vrot.lane.b32.xlu0 %v807, 16
        %v874 = vpop.permute.xlu0 %873
        %877 = vrot.lane.b32.xlu0 %v865, 24
        %v878 = vpop.permute.xlu0 %877
        %v880 = vsel %vm631, %v682, %v870
        %vm881 = vcmask 130048
        %v882 = vsel %vm881, %v880, %v874
        %vm883 = vcmask 195584
        %v884 = vsel %vm883, %v882, %v878
        %v885 = vpack.c.bf16 %v884, %v884
        %v886 = vld [vmem:[#allocation14] sm:$0xf]
        %v887 = vld [vmem:[#allocation14 + $0x4] sm:$0xf]
        %v888 = vld [vmem:[#allocation14 + $0x8] sm:$0xf]
        %v889 = vld [vmem:[#allocation14 + $0xc] sm:$0xf]
        %v894 = vunpack.c.l.b16 %v886
        %v895 = vunpack.c.l.b16 %v887
        %v896 = vunpack.c.l.b16 %v888
        %v897 = vunpack.c.l.b16 %v889
        %v898 = vpack.c.b16 %v895, %v894
        %v899 = vpack.c.b16 %v897, %v896
        %v903 = vsel %vm545, %v885, 0
        %905 = vmatpush.bf16.msra.mxu0 0
        %906 = vmatpush.bf16.msra.mxu0 0
        %907 = vmatpush.bf16.msra.mxu0 0
        %908 = vmatpush.bf16.msra.mxu0 0
        %909 = vmatpush.bf16.msra.mxu0 0
        %910 = vmatpush.bf16.msra.mxu0 0
        %911 = vmatpush.bf16.msra.mxu0 %v899
        %912 = vmatpush.bf16.msra.mxu0 %v898
        %913 = vmatmul.bf16.gmra.mxu0 %v903
        %v914 = vpop.f32.mrf.mxu0
        %v915 = vadd.f32 %v524, %v914
        %v916 = vpop.f32.mrf.mxu0
        %917 = vdwg.mxu0
        %v918 = vsel %vm545, %v915, 0.0
        %919 = vadd.xlane.f32.xlu0 %v918
        %v920 = vpop.xlane.xlu0 %919
        %v921 = vmul.f32 %v920, 0.03125
        %v922 = vmul.f32 %v915, %v915
        %v923 = vsel %vm545, %v922, 0.0
        %924 = vadd.xlane.f32.xlu0 %v923
        %v925 = vpop.xlane.xlu0 %924
        %v926 = vmul.f32 %v925, 0.03125
        %v927 = vmul.f32 %v921, %v921
        %v928 = vsub.f32 %v926, %v927
        %v929 = vsub.f32 %v915, %v921
        %v930 = vadd.f32 %v928, 1e-05
        %v931 = vrsqrt.pop %v930
        %v932 = vmul.f32 %v931, %v930
        %v933 = vmul.f32 %v932, %v931
        %v934 = vmul.f32 0.5, %v933
        %v935 = vsub.f32 1.5, %v934
        %v936 = vmul.f32 %v931, %v935
        %vm937 = vweird.f32 %v930
        %vm938 = vweird.f32 %v931
        %vm939 = vmor %vm937, %vm938
        %v940 = vsel %vm939, %v931, %v936
        %v941 = vmul.f32 %v929, %v940
        %942 = vst.msk [vmem:[%s522] sm:$0xff] %vm545, %v941
        %s943 = sand.u32 %s247, 1
        %s944 = scalar_lea.sflag [#allocation4], %s943
        %s945 = sand.u32 %s247, 1
        %s946 = smul.addr %s945, 8
        %s947 = scalar_lea.vmem [#allocation16], %s946
        // Predicated region
        $region85: #{tpu_custom_call.1} parent=51 // pred_check
          %p948 = pneg %p257
        $region86: #{tpu_custom_call.1} parent=51 // pred_check_branch
          %950 = sbr.rel (%p948) target = $region88
        $region87: #{tpu_custom_call.1} parent=51 // pred_region
          %952 = vsyncadd %s944, 0
          %s953 = sadd.s32 %s38, %s37
          %s954 = smul.addr %s953, 8
          %s955 = scalar_lea.hbm %s8, %s954
          %s957 = sshll.u32 %s947, 4
          %s958 = int_to_ptr.vmem [resolvable:$true] %s957
          %s959 = sshll.u32 %s955, 4
          %s960 = int_to_ptr.hbm [resolvable:$true] %s959
          %962 = dma.vmem_to_hbm [thread:$0]  %s958, 128, %s960, %s944
        $region88: #{tpu_custom_call.1} parent=51 // pred_fallthru
          _
      $region52: #{tpu_custom_call.1} parent=5 // pred_fallthru
        _
      %p963 = scmp.le.s32.totalorder 2, %s28
      // Predicated region
      $region89: #{tpu_custom_call.1} parent=5 // pred_check
        %p964 = pneg %p963
      $region90: #{tpu_custom_call.1} parent=5 // pred_check_branch
        %966 = sbr.rel (%p964) target = $region92
      $region91: #{tpu_custom_call.1} parent=5 // pred_region
        %s967 = ssub.s32 %s28, 2
        // Predicated region
        $region93: #{tpu_custom_call.1} parent=91 // pred_check
          %p968 = pneg %p263
        $region94: #{tpu_custom_call.1} parent=91 // pred_check_branch
          %970 = sbr.rel (%p968) target = $region96
        $region95: #{tpu_custom_call.1} parent=91 // pred_region
          %s971 = sand.u32 %s248, 1
          %s972 = scalar_lea.sflag [#allocation4], %s971
          %s973 = sand.u32 %s248, 1
          %s974 = smul.addr %s973, 8
          %s975 = scalar_lea.vmem [#allocation16], %s974
          %977 = dma.done %s972, 128
        $region96: #{tpu_custom_call.1} parent=91 // pred_fallthru
          _
      $region92: #{tpu_custom_call.1} parent=5 // pred_fallthru
        _
    $region6: #{tpu_custom_call.1} parent=1 // loop_footer
      %s32 = sadd.s32 1, %s28
    $region7: #{tpu_custom_call.1} parent=1 // loop_footer_branch
      %27 = sbr.rel target = $region3
    $region8: #{tpu_custom_call.1} parent=1 // loop_exit
      _
    %978 = vsyncpa [#allocation3], 1
    %s979 = scalar_lea.sflag [#allocation3], 1
    %980 = vsyncpa %s979, 1
    %981 = vsyncpa [#allocation6], 1
    %s982 = scalar_lea.sflag [#allocation6], 1
    %983 = vsyncpa %s982, 1
    %984 = vsyncpa [#allocation9], 1
    %s985 = scalar_lea.sflag [#allocation9], 1
    %986 = vsyncpa %s985, 1
    %987 = vsyncpa [#allocation12], 1
    %988 = vsyncpa [#allocation15], 1
    %989 = vsyncpa [#allocation4], 1
    %s990 = scalar_lea.sflag [#allocation4], 1
    %991 = vsyncpa %s990, 1

</llo_original>
